<compile_context>
chip_gen: v7x
topology: tpu7x:2x2x1
jax: 0.10.0
libtpu: 0.0.40
codegen_flags: <defaults>
</compile_context>

<pallas_src>
import math

import jax
import jax.numpy as jnp
from jax.experimental import pallas as pl
from jax.experimental.pallas import tpu as pltpu


# ---------------------------------------------------------------------------
# Pallas kernels
# ---------------------------------------------------------------------------
def _data_embedding_kernel(x_ref, w_ref, pe_ref, o_ref):
    # Batch-tiled path (circular shift done in-kernel via XLU roll).
    # x_ref : (TB, L, c_in)       input slab (f32 or bf16)
    # w_ref : (3*c_in, d_model)   rows [k=0 taps | k=1 taps | k=2 taps]
    # pe_ref: (L, d_model)        sinusoidal positional embedding (f32)
    # o_ref : (TB, L, d_model)
    tb, L, c_in = x_ref.shape
    d_model = o_ref.shape[-1]

    x = x_ref[...]                                   # (TB, L, c_in)
    x_prev = pltpu.roll(x, shift=1, axis=1)          # x[t-1]  (pairs with k=0 taps)
    x_next = pltpu.roll(x, shift=L - 1, axis=1)      # x[t+1]  (pairs with k=2 taps)

    # Single fused GEMM over K = 3*c_in (one MXU weight push / drain).
    # NOTE: keep L a multiple of the sublane pack (8 f32 / 16 bf16) so the
    # leading-dim collapse below stays a no-copy relayout.
    x_cat = jnp.concatenate([x_prev, x, x_next], axis=-1)       # (TB, L, 3*c_in)
    x_cat = x_cat.reshape(tb * L, 3 * c_in)
    y = jnp.dot(x_cat, w_ref[...], preferred_element_type=jnp.float32)

    y = y.reshape(tb, L, d_model) + pe_ref[...][None, :, :]     # f32 epilogue
    o_ref[...] = y.astype(o_ref.dtype)


def _data_embedding_preshift_kernel(xs_ref, w_ref, pe_ref, o_ref):
    # Sequence-tiled path: the circular shift/concat was hoisted to the wrapper,
    # so each block is an independent (TL, 3*c_in) GEMM (no in-kernel roll).
    # xs_ref: (TL, 3*c_in), w_ref: (3*c_in, d_model), pe_ref: (TL, d_model)
    y = jnp.dot(xs_ref[...], w_ref[...], preferred_element_type=jnp.float32)
    o_ref[...] = (y + pe_ref[...]).astype(o_ref.dtype)


# ---------------------------------------------------------------------------
# Helpers
# ---------------------------------------------------------------------------
def sinusoidal_positional_embedding(L, d_model):
    """PositionalEmbedding.pe[:, :L] — depends only on (L, d_model); build once."""
    assert d_model % 2 == 0, "PositionalEmbedding assumes even d_model"
    position = jnp.arange(L, dtype=jnp.float32)[:, None]
    div_term = jnp.exp(jnp.arange(0, d_model, 2, dtype=jnp.float32)
                       * (-math.log(10000.0) / d_model))
    pe = jnp.zeros((L, d_model), dtype=jnp.float32)
    pe = pe.at[:, 0::2].set(jnp.sin(position * div_term))
    pe = pe.at[:, 1::2].set(jnp.cos(position * div_term))
    return pe


def _vmem_capacity_bytes():
    try:
        return int(pltpu.get_tpu_info().vmem_capacity_bytes)
    except Exception:
        return 64 * 1024 * 1024        # conservative: v7x per-TensorCore VMEM


def _num_tensorcores():
    """1 for single-TC inference parts (v5e/v6e), 2 for megacore-style parts."""
    try:
        kind = jax.devices()[0].device_kind.lower()
    except Exception:
        return 2
    if "lite" in kind or "v5e" in kind or "v6e" in kind:
        return 1
    return 2        # v4 / v5p / v7x style; worst case only affects tiling, not numerics


def _round_up(v, m):
    return ((v + m - 1) // m) * m


def _padded_bytes(second_minor, minor, itemsize, leading=1):
    """VMEM bytes for a (leading, second_minor, minor) block incl. lane/sublane padding."""
    sublane = 8 * (4 // max(itemsize, 1))          # f32: 8, bf16: 16, int8: 32
    return leading * _round_up(second_minor, sublane) * _round_up(minor, 128) * itemsize


def _pick_batch_tile(B, L, c_in, d_model, in_itemsize, out_itemsize,
                     vmem_budget, num_cores):
    """Largest TB dividing B whose true VMEM working set fits the budget.
    Counts padded DMA blocks, double-buffering of grid-varying blocks and the
    kernel's f32 intermediates.  Prefers step counts balanced across TCs."""
    # grid-invariant blocks (single-buffered): fused conv weight + PE
    resident = (_padded_bytes(3 * c_in, d_model, in_itemsize)
                + _padded_bytes(L, d_model, 4))

    def working_set(tb):
        x_blk = _padded_bytes(L, c_in, in_itemsize, leading=tb)
        o_blk = _padded_bytes(L, d_model, out_itemsize, leading=tb)
        cat_blk = _padded_bytes(L, 3 * c_in, in_itemsize, leading=tb)
        # 2 rolled copies + lane-concat of x + f32 GEMM / PE-add slab
        interm = 2 * x_blk + cat_blk + _padded_bytes(L, d_model, 4, leading=tb)
        return resident + 2 * x_blk + 2 * o_blk + interm

    fitting = [tb for tb in range(1, B + 1)
               if B % tb == 0 and working_set(tb) <= vmem_budget]
    if not fitting:
        return 1

    def score(tb):
        steps = B // tb
        balanced = (num_cores == 1) or (steps >= num_cores and steps % num_cores == 0)
        return (balanced, tb)

    return max(fitting, key=score)


def _pick_seq_tile(B, L, c_in, d_model, in_itemsize, out_itemsize,
                   vmem_budget, num_cores):
    """Largest sublane-aligned TL dividing L for the pre-shifted path; None if
    no tiling yields more than one grid step."""
    sublane = 8 * (4 // max(in_itemsize, 1))
    resident = _padded_bytes(3 * c_in, d_model, in_itemsize)    # weight (single-buffered)

    def working_set(tl):
        x_blk = _padded_bytes(tl, 3 * c_in, in_itemsize)
        o_blk = _padded_bytes(tl, d_model, out_itemsize)
        pe_blk = _padded_bytes(tl, d_model, 4)                  # varies with l -> 2 bufs
        interm = _padded_bytes(tl, d_model, 4)
        return resident + 2 * (x_blk + o_blk + pe_blk) + interm

    fitting = []
    for tl in range(sublane, L + 1, sublane):
        if L % tl:
            continue
        if B * (L // tl) < 2:
            continue
        if working_set(tl) <= vmem_budget:
            fitting.append(tl)
    if not fitting:
        return None

    def score(tl):
        steps = B * (L // tl)
        balanced = (num_cores == 1) or (steps % num_cores == 0)
        return (balanced, tl)

    return max(fitting, key=score)


# ---------------------------------------------------------------------------
# Wrapper
# ---------------------------------------------------------------------------
def data_embedding_pallas(x, conv_weight, pe=None, *,
                          compute_dtype=jnp.bfloat16, out_dtype=None,
                          seq_tiling=None):
    """Forward pass of DataEmbedding (eval mode).

    x           : (B, L, c_in)
    conv_weight : (d_model, c_in, 3)   PyTorch Conv1d weight layout
    pe          : optional (L, d_model) precomputed positional embedding
    seq_tiling  : None = auto (used when batch tiling cannot balance the TCs),
                  True/False to force the sequence-tiled / batch-tiled path.
    returns     : (B, L, d_model) in out_dtype (defaults to compute_dtype)
    """
    B, L, c_in = x.shape
    d_model = conv_weight.shape[0]
    assert conv_weight.shape == (d_model, c_in, 3)
    if pe is None:
        pe = sinusoidal_positional_embedding(L, d_model)   # hoist at init in real use
    assert pe.shape == (L, d_model)
    if out_dtype is None:
        out_dtype = compute_dtype

    # Fused weight: w_flat[k*c_in + c, d] = W_torch[d, c, k]
    # (rows 0:c_in pair with x[t-1], c_in:2c_in with x[t], 2c_in:3c_in with x[t+1]).
    w_flat = jnp.transpose(conv_weight, (2, 1, 0)).reshape(3 * c_in, d_model)
    w_flat = w_flat.astype(compute_dtype)
    x_c = x.astype(compute_dtype)
    pe_f32 = pe.astype(jnp.float32)

    in_itemsize = jnp.dtype(compute_dtype).itemsize
    out_itemsize = jnp.dtype(out_dtype).itemsize

    # Generation-aware VMEM sizing (~80% of physical as the scoped limit,
    # ~90% of that as the tile-sizing budget).
    vmem_limit = int(_vmem_capacity_bytes() * 0.8)
    vmem_budget = int(vmem_limit * 0.9)
    num_cores = _num_tensorcores()

    tb = _pick_batch_tile(B, L, c_in, d_model, in_itemsize, out_itemsize,
                          vmem_budget, num_cores)
    steps = B // tb
    if seq_tiling is None:
        seq_tiling = (num_cores >= 2
                      and (steps < num_cores or steps % num_cores != 0))
    tl = None
    if seq_tiling:
        tl = _pick_seq_tile(B, L, c_in, d_model, in_itemsize, out_itemsize,
                            vmem_budget, num_cores)
        if tl is None:
            seq_tiling = False

    flops = 2 * B * L * (3 * c_in) * d_model
    in_cols = 3 * c_in if seq_tiling else c_in
    bytes_accessed = (B * L * in_cols * in_itemsize
                      + 3 * c_in * d_model * in_itemsize
                      + L * d_model * 4
                      + B * L * d_model * out_itemsize)
    cost = pl.CostEstimate(flops=flops, transcendentals=0,
                           bytes_accessed=bytes_accessed)

    def run(single_buffer_invariants):
        # Grid-invariant blocks never get re-fetched; single-buffer them to free VMEM.
        inv = ({"pipeline_mode": pl.Buffered(1)} if single_buffer_invariants else {})

        if seq_tiling:
            # Circular shift hoisted to the wrapper (~3x input HBM bytes, small vs
            # the d_model-wide output); enables splitting the grid along L.
            x_shift = jnp.concatenate(
                [jnp.roll(x_c, 1, axis=1), x_c, jnp.roll(x_c, -1, axis=1)], axis=-1)
            grid = (B, L // tl)
            kernel = _data_embedding_preshift_kernel
            in_specs = [
                pl.BlockSpec((None, tl, 3 * c_in), lambda b, l: (b, l, 0)),
                pl.BlockSpec((3 * c_in, d_model), lambda b, l: (0, 0), **inv),
                pl.BlockSpec((tl, d_model), lambda b, l: (l, 0)),
            ]
            out_spec = pl.BlockSpec((None, tl, d_model), lambda b, l: (b, l, 0))
            semantics = ("parallel", "parallel")
            args = (x_shift, w_flat, pe_f32)
        else:
            grid = (B // tb,)
            kernel = _data_embedding_kernel
            in_specs = [
                pl.BlockSpec((tb, L, c_in), lambda b: (b, 0, 0)),
                pl.BlockSpec((3 * c_in, d_model), lambda b: (0, 0), **inv),
                pl.BlockSpec((L, d_model), lambda b: (0, 0), **inv),
            ]
            out_spec = pl.BlockSpec((tb, L, d_model), lambda b: (b, 0, 0))
            semantics = ("parallel",)
            args = (x_c, w_flat, pe_f32)

        return pl.pallas_call(
            kernel,
            out_shape=jax.ShapeDtypeStruct((B, L, d_model), out_dtype),
            grid_spec=pltpu.PrefetchScalarGridSpec(
                num_scalar_prefetch=0, grid=grid,
                in_specs=in_specs, out_specs=out_spec),
            compiler_params=pltpu.CompilerParams(
                dimension_semantics=semantics,
                vmem_limit_bytes=vmem_limit),
            cost_estimate=cost,
        )(*args)

    try:
        out = run(True)
    except Exception:
        # This JAX build rejected pl.Buffered(1) on the invariant inputs; the
        # only cost of the fallback is the extra (small) double buffers.
        out = run(False)

    # Dropout(p=0.1) is the identity in eval mode.
    # TODO(synk): training-mode dropout (PRNG mask + 1/(1-p) scale) not implemented.
    return out


# ---------------------------------------------------------------------------
# Pure-JAX references
# ---------------------------------------------------------------------------
def data_embedding_ref_gemm(x, conv_weight, pe, precision=None):
    """Same conv->GEMM lowering as the kernel (roll + concat + fused weight)."""
    c_in = x.shape[-1]
    d_model = conv_weight.shape[0]
    x_shift = jnp.concatenate(
        [jnp.roll(x, 1, axis=1), x, jnp.roll(x, -1, axis=1)], axis=-1)
    w_flat = jnp.transpose(conv_weight, (2, 1, 0)).reshape(3 * c_in, d_model)
    tok = jnp.einsum("blc,cd->bld", x_shift, w_flat, precision=precision)
    return tok + pe[None]


def data_embedding_ref_conv(x, conv_weight, pe):
    """Independent reference: circular-pad + VALID conv (mirrors PyTorch Conv1d)."""
    xt = jnp.transpose(x, (0, 2, 1))                           # (B, c_in, L)
    xp = jnp.pad(xt, ((0, 0), (0, 0), (1, 1)), mode="wrap")    # circular pad = 1
    y = jax.lax.conv_general_dilated(
        xp, conv_weight, window_strides=(1,), padding="VALID",
        dimension_numbers=("NCH", "OIH", "NCH"),
        precision=jax.lax.Precision.HIGHEST)                   # (B, d_model, L)
    return jnp.transpose(y, (0, 2, 1)) + pe[None]


if __name__ == "__main__":
    # Small shapes consistent with DataEmbedding on a (B, L, c_in) series.
    # d_model = 128 keeps the output lane-dense; L = 32 keeps the in-kernel
    # (TB, L, *) -> (TB*L, *) collapse sublane-aligned for both f32 and bf16.
    B, L, c_in, d_model = 4, 32, 4, 128

    key = jax.random.PRNGKey(0)
    kx, kw = jax.random.split(key)
    x = jax.random.normal(kx, (B, L, c_in), dtype=jnp.float32)

    # Conv1d kaiming_normal_(mode='fan_in', nonlinearity='leaky_relu') init.
    fan_in = c_in * 3
    gain = math.sqrt(2.0 / (1.0 + 0.01 ** 2))
    std = gain / math.sqrt(fan_in)
    conv_weight = std * jax.random.normal(kw, (d_model, c_in, 3), dtype=jnp.float32)

    pe = sinusoidal_positional_embedding(L, d_model)

    # 1) Validate the conv->GEMM lowering against an independent circular conv.
    ref_conv = data_embedding_ref_conv(x, conv_weight, pe)
    ref = data_embedding_ref_gemm(x, conv_weight, pe,
                                  precision=jax.lax.Precision.HIGHEST)
    assert jnp.allclose(ref, ref_conv, atol=1e-5, rtol=1e-5), \
        "conv->GEMM lowering mismatch"

    # 2) f32 kernel, batch-tiled path (strict check).
    out_f32 = jax.block_until_ready(
        data_embedding_pallas(x, conv_weight, pe, compute_dtype=jnp.float32,
                              seq_tiling=False))
    assert out_f32.shape == (B, L, d_model) and out_f32.dtype == jnp.float32
    assert jnp.allclose(out_f32, ref, atol=1e-4, rtol=1e-5), "f32 batch-path mismatch"

    # 3) f32 kernel, pre-shifted sequence-tiled path (small-batch megacore fallback).
    out_seq = jax.block_until_ready(
        data_embedding_pallas(x, conv_weight, pe, compute_dtype=jnp.float32,
                              seq_tiling=True))
    assert jnp.allclose(out_seq, ref, atol=1e-4, rtol=1e-5), "f32 seq-path mismatch"

    # 4) bf16 fast path (bandwidth-optimized; f32 accumulation; loose check).
    out_bf16 = jax.block_until_ready(
        data_embedding_pallas(x, conv_weight, pe, compute_dtype=jnp.bfloat16))
    assert out_bf16.dtype == jnp.bfloat16
    assert jnp.allclose(out_bf16.astype(jnp.float32), ref, atol=5e-2, rtol=5e-2), \
        "bf16 kernel mismatch"

    print("KERNEL_OK")
</pallas_src>

<mosaic_0001>
module attributes {stable_mosaic.version = 11 : i64} {
  func.func @_data_embedding_kernel(%arg0: i32, %arg1: memref<2x32x4xf32, #tpu.memory_space<vmem>>, %arg2: memref<12x128xf32, #tpu.memory_space<vmem>>, %arg3: memref<32x128xf32, #tpu.memory_space<vmem>>, %arg4: memref<2x32x128xf32, #tpu.memory_space<vmem>>) attributes {dimension_semantics = [#tpu.dimension_semantics<parallel>], iteration_bounds = array<i64: 2>, scalar_prefetch = 0 : i64, scratch_operands = 0 : i64, tpu.core_type = #tpu.core_type<tc>, window_params = [{transform_indices = @transform_0, window_bounds = array<i64: 2, 32, 4>}, {pipeline_mode = #tpu.pipeline_mode<synchronous>, transform_indices = @transform_1, window_bounds = array<i64: 12, 128>}, {pipeline_mode = #tpu.pipeline_mode<synchronous>, transform_indices = @transform_2, window_bounds = array<i64: 32, 128>}, {transform_indices = @transform_3, window_bounds = array<i64: 2, 32, 128>}]} {
    %c0 = arith.constant 0 : index
    %c0_0 = arith.constant 0 : index
    %c0_1 = arith.constant 0 : index
    %0 = vector.load %arg1[%c0, %c0_0, %c0_1] : memref<2x32x4xf32, #tpu.memory_space<vmem>>, vector<2x32x4xf32>
    %c1_i32 = arith.constant 1 : i32
    %1 = tpu.dynamic_rotate %0 by %c1_i32 dim 1 : vector<2x32x4xf32>, i32 -> vector<2x32x4xf32>
    %c31_i32 = arith.constant 31 : i32
    %2 = tpu.dynamic_rotate %0 by %c31_i32 dim 1 : vector<2x32x4xf32>, i32 -> vector<2x32x4xf32>
    %3 = tpu.concatenate %1, %0, %2 in 2 : vector<2x32x4xf32>, vector<2x32x4xf32>, vector<2x32x4xf32> -> vector<2x32x12xf32>
    %4 = vector.shape_cast %3 : vector<2x32x12xf32> to vector<64x12xf32>
    %c0_2 = arith.constant 0 : index
    %c0_3 = arith.constant 0 : index
    %5 = vector.load %arg2[%c0_2, %c0_3] : memref<12x128xf32, #tpu.memory_space<vmem>>, vector<12x128xf32>
    %cst = arith.constant dense<0.000000e+00> : vector<64x128xf32>
    %6 = tpu.matmul %4, %5, %cst {dimension_numbers = #tpu.dot_dimension_numbers<[1], [0], [0], [1], [0, 0, 1, 1], [], []>} : vector<64x12xf32>, vector<12x128xf32>, vector<64x128xf32> -> vector<64x128xf32>
    %7 = vector.shape_cast %6 : vector<64x128xf32> to vector<2x32x128xf32>
    %c0_4 = arith.constant 0 : index
    %c0_5 = arith.constant 0 : index
    %8 = vector.load %arg3[%c0_4, %c0_5] : memref<32x128xf32, #tpu.memory_space<vmem>>, vector<32x128xf32>
    %9 = vector.shape_cast %8 : vector<32x128xf32> to vector<1x32x128xf32>
    %10 = vector.broadcast %9 : vector<1x32x128xf32> to vector<2x32x128xf32>
    %11 = arith.addf %7, %10 : vector<2x32x128xf32>
    %c0_6 = arith.constant 0 : index
    %c0_7 = arith.constant 0 : index
    %c0_8 = arith.constant 0 : index
    %12 = vector.load %arg4[%c0_6, %c0_7, %c0_8] : memref<2x32x128xf32, #tpu.memory_space<vmem>>, vector<2x32x128xf32>
    tpu.vector_store %arg4[%c0_6, %c0_7, %c0_8], %11 {strides = array<i32>} : memref<2x32x128xf32, #tpu.memory_space<vmem>>, vector<2x32x128xf32>,
    return
  }
  func.func @transform_0(%arg0: i32) -> (i32, i32, i32) {
    %c0_i32 = arith.constant 0 : i32
    %c0_i32_0 = arith.constant 0 : i32
    %c0_i32_1 = arith.constant 0 : i32
    return %arg0, %c0_i32, %c0_i32_0 : i32, i32, i32
  }
  func.func @transform_1(%arg0: i32) -> (i32, i32) {
    %c0_i32 = arith.constant 0 : i32
    %c0_i32_0 = arith.constant 0 : i32
    %c0_i32_1 = arith.constant 0 : i32
    return %c0_i32, %c0_i32_0 : i32, i32
  }
  func.func @transform_2(%arg0: i32) -> (i32, i32) {
    %c0_i32 = arith.constant 0 : i32
    %c0_i32_0 = arith.constant 0 : i32
    %c0_i32_1 = arith.constant 0 : i32
    return %c0_i32, %c0_i32_0 : i32, i32
  }
  func.func @transform_3(%arg0: i32) -> (i32, i32, i32) {
    %c0_i32 = arith.constant 0 : i32
    %c0_i32_0 = arith.constant 0 : i32
    %c0_i32_1 = arith.constant 0 : i32
    return %arg0, %c0_i32, %c0_i32_0 : i32, i32, i32
  }
}

module attributes {stable_mosaic.version = 11 : i64} {
  func.func @_data_embedding_kernel(%arg0: i32, %arg1: memref<2x32x4xf32, #tpu.memory_space<vmem>>, %arg2: memref<12x128xf32, #tpu.memory_space<vmem>>, %arg3: memref<32x128xf32, #tpu.memory_space<vmem>>, %arg4: memref<2x32x128xf32, #tpu.memory_space<vmem>>) attributes {dimension_semantics = [#tpu.dimension_semantics<parallel>], iteration_bounds = array<i64: 2>, scalar_prefetch = 0 : i64, scratch_operands = 0 : i64, tpu.core_type = #tpu.core_type<tc>, window_params = [{transform_indices = @transform_0, window_bounds = array<i64: 2, 32, 4>}, {pipeline_mode = #tpu.pipeline_mode<synchronous>, transform_indices = @transform_1, window_bounds = array<i64: 12, 128>}, {pipeline_mode = #tpu.pipeline_mode<synchronous>, transform_indices = @transform_2, window_bounds = array<i64: 32, 128>}, {transform_indices = @transform_3, window_bounds = array<i64: 2, 32, 128>}]} {
    %c0 = arith.constant 0 : index
    %c0_0 = arith.constant 0 : index
    %c0_1 = arith.constant 0 : index
    %0 = vector.load %arg1[%c0, %c0_0, %c0_1] : memref<2x32x4xf32, #tpu.memory_space<vmem>>, vector<2x32x4xf32>
    %c1_i32 = arith.constant 1 : i32
    %1 = tpu.dynamic_rotate %0 by %c1_i32 dim 1 : vector<2x32x4xf32>, i32 -> vector<2x32x4xf32>
    %c31_i32 = arith.constant 31 : i32
    %2 = tpu.dynamic_rotate %0 by %c31_i32 dim 1 : vector<2x32x4xf32>, i32 -> vector<2x32x4xf32>
    %3 = tpu.concatenate %1, %0, %2 in 2 : vector<2x32x4xf32>, vector<2x32x4xf32>, vector<2x32x4xf32> -> vector<2x32x12xf32>
    %4 = vector.shape_cast %3 : vector<2x32x12xf32> to vector<64x12xf32>
    %c0_2 = arith.constant 0 : index
    %c0_3 = arith.constant 0 : index
    %5 = vector.load %arg2[%c0_2, %c0_3] : memref<12x128xf32, #tpu.memory_space<vmem>>, vector<12x128xf32>
    %cst = arith.constant dense<0.000000e+00> : vector<64x128xf32>
    %6 = tpu.matmul %4, %5, %cst {dimension_numbers = #tpu.dot_dimension_numbers<[1], [0], [0], [1], [0, 0, 1, 1], [], []>} : vector<64x12xf32>, vector<12x128xf32>, vector<64x128xf32> -> vector<64x128xf32>
    %7 = vector.shape_cast %6 : vector<64x128xf32> to vector<2x32x128xf32>
    %c0_4 = arith.constant 0 : index
    %c0_5 = arith.constant 0 : index
    %8 = vector.load %arg3[%c0_4, %c0_5] : memref<32x128xf32, #tpu.memory_space<vmem>>, vector<32x128xf32>
    %9 = vector.shape_cast %8 : vector<32x128xf32> to vector<1x32x128xf32>
    %10 = vector.broadcast %9 : vector<1x32x128xf32> to vector<2x32x128xf32>
    %11 = arith.addf %7, %10 : vector<2x32x128xf32>
    %c0_6 = arith.constant 0 : index
    %c0_7 = arith.constant 0 : index
    %c0_8 = arith.constant 0 : index
    %12 = vector.load %arg4[%c0_6, %c0_7, %c0_8] : memref<2x32x128xf32, #tpu.memory_space<vmem>>, vector<2x32x128xf32>
    tpu.vector_store %arg4[%c0_6, %c0_7, %c0_8], %11 {strides = array<i32>} : memref<2x32x128xf32, #tpu.memory_space<vmem>>, vector<2x32x128xf32>,
    return
  }
  func.func @transform_0(%arg0: i32) -> (i32, i32, i32) {
    %c0_i32 = arith.constant 0 : i32
    %c0_i32_0 = arith.constant 0 : i32
    %c0_i32_1 = arith.constant 0 : i32
    return %arg0, %c0_i32, %c0_i32_0 : i32, i32, i32
  }
  func.func @transform_1(%arg0: i32) -> (i32, i32) {
    %c0_i32 = arith.constant 0 : i32
    %c0_i32_0 = arith.constant 0 : i32
    %c0_i32_1 = arith.constant 0 : i32
    return %c0_i32, %c0_i32_0 : i32, i32
  }
  func.func @transform_2(%arg0: i32) -> (i32, i32) {
    %c0_i32 = arith.constant 0 : i32
    %c0_i32_0 = arith.constant 0 : i32
    %c0_i32_1 = arith.constant 0 : i32
    return %c0_i32, %c0_i32_0 : i32, i32
  }
  func.func @transform_3(%arg0: i32) -> (i32, i32, i32) {
    %c0_i32 = arith.constant 0 : i32
    %c0_i32_0 = arith.constant 0 : i32
    %c0_i32_1 = arith.constant 0 : i32
    return %arg0, %c0_i32, %c0_i32_0 : i32, i32, i32
  }
}

</mosaic_0001>

<llo_original>
// kernel: tpu_custom_call.1
$region0: #{tpu_custom_call.1}
  #allocation0 [shape = 'u32[]', space=smem, size = 0x4, offset = 0x4, fixed_abs, tag = 'smem constant byte address 0x4 - core index']
  #allocation1 [shape = 'u32[144,128]{1,0:T(1,128)}', space=vmem, size = 0x12000, scoped, tag = 'internal scratch']
  %s0 = inlined_call_operand.vmem [shape: f32[4,32,4], index: 0, kind: input, shape index: {}]
  %s1 = inlined_call_operand.vmem [shape: f32[12,128], index: 1, kind: input, shape index: {}]
  %s2 = inlined_call_operand.vmem [shape: f32[32,128], index: 2, kind: input, shape index: {}]
  %s3 = inlined_call_operand.hbm [shape: f32[4,32,128], index: 3, kind: output, shape index: {}]
  %s4 = sld [smem:[#allocation0]]
  $region45: #{tpu_custom_call.1} parent=0
    _
  %s6 = ssub.s32 1, %s4
  %s7 = scalar_select 0, %s6, %s4
  $region1: #{tpu_custom_call.1} parent=0
    #allocation2 [shape = 'u8[65536]{0}', space=vmem, size = 0x10000, scoped, tag = 'output window, operand 0']
    #allocation3 [shape = 's32[2]{0}', space=sflag, size = 0x8, scoped, tag = 'scoped memory for tpu_custom_call.1']
    %8 = vsyncpa [#allocation3], 0
    %s9 = scalar_lea.sflag [#allocation3], 1
    %10 = vsyncpa %s9, 0
    loop: start=0, step=1, limit=4
    $region2: #{tpu_custom_call.1} parent=1 // loop_pre_header
      _
    $region3: #{tpu_custom_call.1} parent=1 // loop_header
      %s12 = sphi 0, %s16
      %p13 = scmp.ge.s32.totalorder %s12, 4
      %s22 = sphi 0, %s24
      %s25 = sphi 0, %s22
      %s26 = sphi 0, %s25
      %s42 = sphi 0, %s26
      %s46 = sphi 0, %s46
      %s48 = sphi 0, %s46
      %s49 = sphi 0, %s48
      %s63 = sphi 0, %s49
      %s67 = sphi 0, %s67
      %s69 = sphi 0, %s67
      %s70 = sphi 0, %s69
      %s84 = sphi 0, %s70
      %s90 = sphi 0, %s92
      %s93 = sphi 0, %s90
      %s94 = sphi 0, %s93
      %s110 = sphi 0, %s94
    $region4: #{tpu_custom_call.1} parent=1 // loop_header_branch
      %15 = sbr.rel (%p13) target = $region8
    $region5: #{tpu_custom_call.1} parent=1 // loop_body
      %s17 = ssub.s32 %s12, 1
      %s18 = ssub.s32 %s12, 2
      %s19 = sadd.s32 %s12, 1
      %s20 = ssub.s32 %s12, %s19
      %p21 = scmp.eq.s32.totalorder %s20, 0
      %s23 = sadd.s32 %s22, 1
      %s24 = scalar_select %p21, %s22, %s23
      %p27 = pneg %p21
      %p28 = scmp.eq.s32.totalorder %s12, 1
      %p29 = por %p27, %p28
      %p30 = scmp.ne.s32.totalorder %s22, %s25
      %p31 = scmp.eq.s32.totalorder %s12, 0
      %p32 = por %p30, %p31
      %p33 = scmp.ne.s32.totalorder %s22, %s25
      %p34 = scmp.eq.s32.totalorder %s17, 1
      %p35 = por %p33, %p34
      %p36 = scmp.ne.s32.totalorder %s25, %s26
      %p37 = scmp.eq.s32.totalorder %s17, 0
      %p38 = por %p36, %p37
      %p39 = scmp.ne.s32.totalorder %s25, %s26
      %p40 = scmp.eq.s32.totalorder %s18, 1
      %p41 = por %p39, %p40
      %p43 = scmp.ne.s32.totalorder %s26, %s42
      %p44 = scmp.eq.s32.totalorder %s18, 0
      %p45 = por %p43, %p44
      %s47 = sadd.s32 %s46, 1
      %p50 = scmp.eq.s32.totalorder %s12, 1
      %p51 = scmp.ne.s32.totalorder %s46, %s48
      %p52 = scmp.eq.s32.totalorder %s12, 0
      %p53 = por %p51, %p52
      %p54 = scmp.ne.s32.totalorder %s46, %s48
      %p55 = scmp.eq.s32.totalorder %s17, 1
      %p56 = por %p54, %p55
      %p57 = scmp.ne.s32.totalorder %s48, %s49
      %p58 = scmp.eq.s32.totalorder %s17, 0
      %p59 = por %p57, %p58
      %p60 = scmp.ne.s32.totalorder %s48, %s49
      %p61 = scmp.eq.s32.totalorder %s18, 1
      %p62 = por %p60, %p61
      %p64 = scmp.ne.s32.totalorder %s49, %s63
      %p65 = scmp.eq.s32.totalorder %s18, 0
      %p66 = por %p64, %p65
      %s68 = sadd.s32 %s67, 1
      %p71 = scmp.eq.s32.totalorder %s12, 1
      %p72 = scmp.ne.s32.totalorder %s67, %s69
      %p73 = scmp.eq.s32.totalorder %s12, 0
      %p74 = por %p72, %p73
      %p75 = scmp.ne.s32.totalorder %s67, %s69
      %p76 = scmp.eq.s32.totalorder %s17, 1
      %p77 = por %p75, %p76
      %p78 = scmp.ne.s32.totalorder %s69, %s70
      %p79 = scmp.eq.s32.totalorder %s17, 0
      %p80 = por %p78, %p79
      %p81 = scmp.ne.s32.totalorder %s69, %s70
      %p82 = scmp.eq.s32.totalorder %s18, 1
      %p83 = por %p81, %p82
      %p85 = scmp.ne.s32.totalorder %s70, %s84
      %p86 = scmp.eq.s32.totalorder %s18, 0
      %p87 = por %p85, %p86
      %s88 = ssub.s32 %s12, %s19
      %p89 = scmp.eq.s32.totalorder %s88, 0
      %s91 = sadd.s32 %s90, 1
      %s92 = scalar_select %p89, %s90, %s91
      %p95 = pneg %p89
      %p96 = scmp.eq.s32.totalorder %s12, 1
      %p97 = por %p95, %p96
      %p98 = scmp.ne.s32.totalorder %s90, %s93
      %p99 = scmp.eq.s32.totalorder %s12, 0
      %p100 = por %p98, %p99
      %p101 = scmp.ne.s32.totalorder %s90, %s93
      %p102 = scmp.eq.s32.totalorder %s17, 1
      %p103 = por %p101, %p102
      %p104 = scmp.ne.s32.totalorder %s93, %s94
      %p105 = scmp.eq.s32.totalorder %s17, 0
      %p106 = por %p104, %p105
      %p107 = scmp.ne.s32.totalorder %s93, %s94
      %p108 = scmp.eq.s32.totalorder %s18, 1
      %p109 = por %p107, %p108
      %p111 = scmp.ne.s32.totalorder %s94, %s110
      %p112 = scmp.eq.s32.totalorder %s18, 0
      %p113 = por %p111, %p112
      %p114 = scmp.le.s32.totalorder 1, %s12
      %p115 = scmp.lt.s32.totalorder %s12, 3
      %p116 = pnand %p114, %p115
      %p117 = pneg %p116
      // Predicated region
      $region9: #{tpu_custom_call.1} parent=5 // pred_check
        _
      $region10: #{tpu_custom_call.1} parent=5 // pred_check_branch
        %119 = sbr.rel (%p116) target = $region12
      $region11: #{tpu_custom_call.1} parent=5 // pred_region
        %s120 = ssub.s32 %s12, 1
        // Predicated region
        $region13: #{tpu_custom_call.1} parent=11 // pred_check
          %p121 = pneg %p59
        $region14: #{tpu_custom_call.1} parent=11 // pred_check_branch
          %123 = sbr.rel (%p121) target = $region16
        $region15: #{tpu_custom_call.1} parent=11 // pred_region
          _
        $region16: #{tpu_custom_call.1} parent=11 // pred_fallthru
          _
        // Predicated region
        $region17: #{tpu_custom_call.1} parent=11 // pred_check
          %p124 = pneg %p80
        $region18: #{tpu_custom_call.1} parent=11 // pred_check_branch
          %126 = sbr.rel (%p124) target = $region20
        $region19: #{tpu_custom_call.1} parent=11 // pred_region
          _
        $region20: #{tpu_custom_call.1} parent=11 // pred_fallthru
          _
      $region12: #{tpu_custom_call.1} parent=5 // pred_fallthru
        _
      %p127 = scmp.lt.s32.totalorder %s12, 2
      // Predicated region
      $region21: #{tpu_custom_call.1} parent=5 // pred_check
        %p128 = pneg %p127
      $region22: #{tpu_custom_call.1} parent=5 // pred_check_branch
        %130 = sbr.rel (%p128) target = $region24
      $region23: #{tpu_custom_call.1} parent=5 // pred_region
        // Predicated region
        $region25: #{tpu_custom_call.1} parent=23 // pred_check
          %p131 = pneg %p32
        $region26: #{tpu_custom_call.1} parent=23 // pred_check_branch
          %133 = sbr.rel (%p131) target = $region28
        $region27: #{tpu_custom_call.1} parent=23 // pred_region
          %s134 = smul.u32 2, %s12
          %p135 = scmp.lt.s32.totalorder %s134, 3
          %s136 = scalar_select %p135, %s134, 3
          %s137 = smul.addr %s136, 4
          %s138 = smul.addr %s137, 8
          %s139 = scalar_lea.vmem %s0, %s138
          %s140 = smul.u32 2, %s12
        $region28: #{tpu_custom_call.1} parent=23 // pred_fallthru
          _
      $region24: #{tpu_custom_call.1} parent=5 // pred_fallthru
        _
      %p141 = scmp.le.s32.totalorder 1, %s12
      %p142 = scmp.lt.s32.totalorder %s12, 3
      %p143 = pnand %p141, %p142
      %p144 = pneg %p143
      // Predicated region
      $region29: #{tpu_custom_call.1} parent=5 // pred_check
        _
      $region30: #{tpu_custom_call.1} parent=5 // pred_check_branch
        %146 = sbr.rel (%p143) target = $region32
      $region31: #{tpu_custom_call.1} parent=5 // pred_region
        %s147 = ssub.s32 %s12, 1
        %s148 = smul.u32 2, %s17
        %p149 = scmp.lt.s32.totalorder %s148, 3
        %s150 = scalar_select %p149, %s148, 3
        %s151 = smul.addr %s150, 4
        %s152 = smul.addr %s151, 8
        %s153 = scalar_lea.vmem %s0, %s152
        %p154 = pneg %p38
        %p155 = pneg %p35
        %p156 = pneg %p59
        %p157 = pneg %p56
        %p158 = pneg %p80
        %p159 = pneg %p77
        %p160 = pneg %p106
        %p161 = pneg %p103
        %s162 = sand.u32 %s93, 1
        %s163 = scalar_lea.sflag [#allocation3], %s162
        %s164 = sand.u32 %s93, 1
        %s165 = smul.addr %s164, 64
        %s166 = scalar_lea.vmem [#allocation2], %s165
        %s167 = smul.u32 2, %s17
        %p168 = scmp.lt.s32.totalorder %s167, 3
        %s169 = scalar_select %p168, %s167, 3
        %s170 = smul.addr %s169, 4
        %s171 = smul.addr %s170, 8
        %s172 = scalar_lea.vmem %s0, %s171
        %s173 = smul.u32 2, %s17
        %s174 = smul.u32 2, %s17
        %v175 = vld [vmem:[%s172] sm:$0xff]
        %v176 = vld [vmem:[%s172 + $0x8] sm:$0xff]
        %v177 = vld [vmem:[%s172 + $0x10] sm:$0xff]
        %v178 = vld [vmem:[%s172 + $0x18] sm:$0xff]
        %v179 = vld [vmem:[%s172 + $0x20] sm:$0xff]
        %v180 = vld [vmem:[%s172 + $0x28] sm:$0xff]
        %v181 = vld [vmem:[%s172 + $0x30] sm:$0xff]
        %v182 = vld [vmem:[%s172 + $0x38] sm:$0xff]
        %v183 = vrot.slane %v175, 7
        %v184 = vrot.slane %v179, 7
        %v185 = vrot.slane %v176, 7
        %v186 = vrot.slane %v180, 7
        %v187 = vrot.slane %v177, 7
        %v188 = vrot.slane %v181, 7
        %v189 = vrot.slane %v178, 7
        %v190 = vrot.slane %v182, 7
        %v191 = vlaneseq
        %v192 = vshrl.u32 %v191, 7
        %vm193 = vcmp.lt.s32.totalorder %v192, 1
        %v194 = vsel %vm193, %v187, %v189
        %v195 = vsel %vm193, %v188, %v190
        %v196 = vsel %vm193, %v185, %v187
        %v197 = vsel %vm193, %v186, %v188
        %v198 = vsel %vm193, %v183, %v185
        %v199 = vsel %vm193, %v184, %v186
        %v200 = vsel %vm193, %v189, %v183
        %v201 = vsel %vm193, %v190, %v184
        %v202 = vrot.slane %v175, 1
        %v203 = vrot.slane %v179, 1
        %v204 = vrot.slane %v176, 1
        %v205 = vrot.slane %v180, 1
        %v206 = vrot.slane %v177, 1
        %v207 = vrot.slane %v181, 1
        %v208 = vrot.slane %v178, 1
        %v209 = vrot.slane %v182, 1
        %vm210 = vcmp.lt.s32.totalorder %v192, 7
        %v211 = vsel %vm210, %v206, %v208
        %v212 = vsel %vm210, %v207, %v209
        %v213 = vsel %vm210, %v204, %v206
        %v214 = vsel %vm210, %v205, %v207
        %v215 = vsel %vm210, %v202, %v204
        %v216 = vsel %vm210, %v203, %v205
        %v217 = vsel %vm210, %v208, %v202
        %v218 = vsel %vm210, %v209, %v203
        %227 = vrot.lane.b32.xlu0 %v175, 4
        %v228 = vpop.permute.xlu0 %227
        %229 = vrot.lane.b32.xlu0 %v176, 4
        %v230 = vpop.permute.xlu0 %229
        %231 = vrot.lane.b32.xlu0 %v177, 4
        %v232 = vpop.permute.xlu0 %231
        %233 = vrot.lane.b32.xlu0 %v178, 4
        %v234 = vpop.permute.xlu0 %233
        %235 = vrot.lane.b32.xlu0 %v179, 4
        %v236 = vpop.permute.xlu0 %235
        %237 = vrot.lane.b32.xlu0 %v180, 4
        %v238 = vpop.permute.xlu0 %237
        %239 = vrot.lane.b32.xlu0 %v181, 4
        %v240 = vpop.permute.xlu0 %239
        %241 = vrot.lane.b32.xlu0 %v182, 4
        %v242 = vpop.permute.xlu0 %241
        %259 = vrot.lane.b32.xlu0 %v215, 8
        %v260 = vpop.permute.xlu0 %259
        %261 = vrot.lane.b32.xlu0 %v213, 8
        %v262 = vpop.permute.xlu0 %261
        %263 = vrot.lane.b32.xlu0 %v211, 8
        %v264 = vpop.permute.xlu0 %263
        %265 = vrot.lane.b32.xlu0 %v217, 8
        %v266 = vpop.permute.xlu0 %265
        %267 = vrot.lane.b32.xlu0 %v216, 8
        %v268 = vpop.permute.xlu0 %267
        %269 = vrot.lane.b32.xlu0 %v214, 8
        %v270 = vpop.permute.xlu0 %269
        %271 = vrot.lane.b32.xlu0 %v212, 8
        %v272 = vpop.permute.xlu0 %271
        %273 = vrot.lane.b32.xlu0 %v218, 8
        %v274 = vpop.permute.xlu0 %273
        %vm283 = vcmask 31744
        %v284 = vsel %vm283, %v200, %v228
        %v285 = vsel %vm283, %v198, %v230
        %v286 = vsel %vm283, %v196, %v232
        %v287 = vsel %vm283, %v194, %v234
        %v288 = vsel %vm283, %v201, %v236
        %v289 = vsel %vm283, %v199, %v238
        %v290 = vsel %vm283, %v197, %v240
        %v291 = vsel %vm283, %v195, %v242
        %vm292 = vcmask 64512
        %v293 = vsel %vm292, %v284, %v260
        %v294 = vsel %vm292, %v285, %v262
        %v295 = vsel %vm292, %v286, %v264
        %v296 = vsel %vm292, %v287, %v266
        %v297 = vsel %vm292, %v288, %v268
        %v298 = vsel %vm292, %v289, %v270
        %v299 = vsel %vm292, %v290, %v272
        %v300 = vsel %vm292, %v291, %v274
        %v301 = vld [vmem:[%s1] sm:$0xff]
        %v302 = vld [vmem:[%s1 + $0x8] sm:$0xf]
        %vm303 = vcmask 97280
        %v305 = vsel %vm303, %v293, 0
        %v308 = vsel %vm303, %v294, 0
        %v311 = vsel %vm303, %v295, 0
        %v314 = vsel %vm303, %v296, 0
        %v317 = vsel %vm303, %v297, 0
        %v320 = vsel %vm303, %v298, 0
        %v323 = vsel %vm303, %v299, 0
        %v326 = vsel %vm303, %v300, 0
        %vm328 = vcmask 1043456
        %v330 = vsel %vm328, %v302, 0
        %332 = vmatprep.subr.mxu0 0.0
        %333 = vmatpush1.msra.mxu0 %v301
        %334 = vmatprep.subr.mxu0 0.0
        %335 = vmatpush1.msra.mxu0 %v330
        %336 = vmatprep.subr.mxu0 0.0
        %337 = vmatpush1.msra.mxu0 0.0
        %338 = vmatprep.subr.mxu0 0.0
        %339 = vmatpush1.msra.mxu0 0.0
        %340 = vmatprep.subr.mxu0 0.0
        %341 = vmatpush1.msra.mxu0 0.0
        %342 = vmatprep.subr.mxu0 0.0
        %343 = vmatpush1.msra.mxu0 0.0
        %344 = vmatprep.subr.mxu0 0.0
        %345 = vmatpush1.msra.mxu0 0.0
        %346 = vmatprep.subr.mxu0 0.0
        %347 = vmatpush1.msra.mxu0 0.0
        %348 = vmatprep.subr.mxu0 0.0
        %349 = vmatpush1.msra.mxu0 0.0
        %350 = vmatprep.subr.mxu0 0.0
        %351 = vmatpush1.msra.mxu0 0.0
        %352 = vmatprep.subr.mxu0 0.0
        %353 = vmatpush1.msra.mxu0 0.0
        %354 = vmatprep.subr.mxu0 0.0
        %355 = vmatpush1.msra.mxu0 0.0
        %356 = vmatprep.subr.mxu0 0.0
        %357 = vmatpush1.msra.mxu0 0.0
        %358 = vmatprep.subr.mxu0 0.0
        %359 = vmatpush1.msra.mxu0 0.0
        %360 = vmatprep.subr.mxu0 0.0
        %361 = vmatpush1.msra.mxu0 0.0
        %362 = vmatprep.subr.mxu0 0.0
        %363 = vmatpush1.msra.mxu0 0.0
        %364 = vmatprep.subr.mxu0 0.0
        %365 = vmatpush1.msra.mxu0 0.0
        %366 = vmatprep.subr.mxu0 0.0
        %367 = vmatpush1.msra.mxu0 0.0
        %368 = vmatprep.subr.mxu0 0.0
        %369 = vmatpush1.msra.mxu0 0.0
        %370 = vmatprep.subr.mxu0 0.0
        %371 = vmatpush1.msra.mxu0 0.0
        %372 = vmatprep.subr.mxu0 0.0
        %373 = vmatpush1.msra.mxu0 0.0
        %374 = vmatprep.subr.mxu0 0.0
        %375 = vmatpush1.msra.mxu0 0.0
        %376 = vmatprep.subr.mxu0 0.0
        %377 = vmatpush1.msra.mxu0 0.0
        %378 = vmatprep.subr.mxu0 0.0
        %379 = vmatpush1.msra.mxu0 0.0
        %380 = vmatprep.subr.mxu0 0.0
        %381 = vmatpush1.msra.mxu0 0.0
        %382 = vmatprep.subr.mxu0 0.0
        %383 = vmatpush1.msra.mxu0 0.0
        %384 = vmatprep.subr.mxu0 0.0
        %385 = vmatpush1.msra.mxu0 0.0
        %386 = vmatprep.subr.mxu0 0.0
        %387 = vmatpush1.msra.mxu0 0.0
        %388 = vmatprep.subr.mxu0 0.0
        %389 = vmatpush1.msra.mxu0 0.0
        %390 = vmatprep.subr.mxu0 0.0
        %391 = vmatpush1.msra.mxu0 0.0
        %392 = vmatprep.subr.mxu0 0.0
        %393 = vmatpush1.msra.mxu0 0.0
        %394 = vmatprep.subr.mxu0 0.0
        %395 = vmatpush1.msra.mxu0 0.0
        %396 = vmatprep.mubr.f32.mxu0 0.0
        %397 = vmatmul.mubr.f32.gmra.mrb[0].mxu0 %v305
        %v398 = vpop.f32.mrb[0].mxu0
        %v399 = vadd.f32 0.0, %v398
        %v400 = vpop.f32.mrb[0].mxu0
        %401 = vmatprep.mubr.f32.mxu0 0.0
        %402 = vmatmul.mubr.f32.gmra.mrb[0].mxu0 %v308
        %v403 = vpop.f32.mrb[0].mxu0
        %v404 = vadd.f32 0.0, %v403
        %v405 = vpop.f32.mrb[0].mxu0
        %406 = vmatprep.mubr.f32.mxu0 0.0
        %407 = vmatmul.mubr.f32.gmra.mrb[0].mxu0 %v311
        %v408 = vpop.f32.mrb[0].mxu0
        %v409 = vadd.f32 0.0, %v408
        %v410 = vpop.f32.mrb[0].mxu0
        %411 = vmatprep.mubr.f32.mxu0 0.0
        %412 = vmatmul.mubr.f32.gmra.mrb[0].mxu0 %v314
        %v413 = vpop.f32.mrb[0].mxu0
        %v414 = vadd.f32 0.0, %v413
        %v415 = vpop.f32.mrb[0].mxu0
        %416 = vmatprep.mubr.f32.mxu0 0.0
        %417 = vmatmul.mubr.f32.gmra.mrb[0].mxu0 %v317
        %v418 = vpop.f32.mrb[0].mxu0
        %v419 = vadd.f32 0.0, %v418
        %v420 = vpop.f32.mrb[0].mxu0
        %421 = vmatprep.mubr.f32.mxu0 0.0
        %422 = vmatmul.mubr.f32.gmra.mrb[0].mxu0 %v320
        %v423 = vpop.f32.mrb[0].mxu0
        %v424 = vadd.f32 0.0, %v423
        %v425 = vpop.f32.mrb[0].mxu0
        %426 = vmatprep.mubr.f32.mxu0 0.0
        %427 = vmatmul.mubr.f32.gmra.mrb[0].mxu0 %v323
        %v428 = vpop.f32.mrb[0].mxu0
        %v429 = vadd.f32 0.0, %v428
        %v430 = vpop.f32.mrb[0].mxu0
        %431 = vmatprep.mubr.f32.mxu0 0.0
        %432 = vmatmul.mubr.f32.gmra.mrb[0].mxu0 %v326
        %v433 = vpop.f32.mrb[0].mxu0
        %v434 = vadd.f32 0.0, %v433
        %v435 = vpop.f32.mrb[0].mxu0
        %436 = vdwg.mxu0
        %v437 = vld [vmem:[%s2] sm:$0xff]
        %v438 = vld [vmem:[%s2 + $0x8] sm:$0xff]
        %v439 = vld [vmem:[%s2 + $0x10] sm:$0xff]
        %v440 = vld [vmem:[%s2 + $0x18] sm:$0xff]
        %v441 = vadd.f32 %v399, %v437
        %v442 = vadd.f32 %v404, %v438
        %v443 = vadd.f32 %v409, %v439
        %v444 = vadd.f32 %v414, %v440
        %v445 = vadd.f32 %v419, %v437
        %v446 = vadd.f32 %v424, %v438
        %v447 = vadd.f32 %v429, %v439
        %v448 = vadd.f32 %v434, %v440
        %449 = vst [vmem:[%s166] sm:$0xff] %v441
        %450 = vst [vmem:[%s166 + $0x8] sm:$0xff] %v442
        %451 = vst [vmem:[%s166 + $0x10] sm:$0xff] %v443
        %452 = vst [vmem:[%s166 + $0x18] sm:$0xff] %v444
        %453 = vst [vmem:[%s166 + $0x20] sm:$0xff] %v445
        %454 = vst [vmem:[%s166 + $0x28] sm:$0xff] %v446
        %455 = vst [vmem:[%s166 + $0x30] sm:$0xff] %v447
        %456 = vst [vmem:[%s166 + $0x38] sm:$0xff] %v448
        %s457 = sand.u32 %s93, 1
        %s458 = scalar_lea.sflag [#allocation3], %s457
        %s459 = sand.u32 %s93, 1
        %s460 = smul.addr %s459, 64
        %s461 = scalar_lea.vmem [#allocation2], %s460
        // Predicated region
        $region33: #{tpu_custom_call.1} parent=31 // pred_check
          %p462 = pneg %p103
        $region34: #{tpu_custom_call.1} parent=31 // pred_check_branch
          %464 = sbr.rel (%p462) target = $region36
        $region35: #{tpu_custom_call.1} parent=31 // pred_region
          %s465 = smul.u32 2, %s17
          %s467 = ssub.s32 1024, 1024
          %468 = vsyncadd %s458, %s467
          %s469 = smul.addr %s465, 4
          %s470 = smul.addr %s469, 128
          %s471 = scalar_lea.hbm %s3, %s470
          %s472 = sshll.u32 %s461, 4
          %s473 = int_to_ptr.vmem [resolvable:$true] %s472
          %478 = dma.vmem_to_hbm [thread:$0]  %s473, 1024, %s471, %s458, 128, 128, 8
        $region36: #{tpu_custom_call.1} parent=31 // pred_fallthru
          _
      $region32: #{tpu_custom_call.1} parent=5 // pred_fallthru
        _
      %p479 = scmp.le.s32.totalorder 2, %s12
      // Predicated region
      $region37: #{tpu_custom_call.1} parent=5 // pred_check
        %p480 = pneg %p479
      $region38: #{tpu_custom_call.1} parent=5 // pred_check_branch
        %482 = sbr.rel (%p480) target = $region40
      $region39: #{tpu_custom_call.1} parent=5 // pred_region
        %s483 = ssub.s32 %s12, 2
        // Predicated region
        $region41: #{tpu_custom_call.1} parent=39 // pred_check
          %p484 = pneg %p109
        $region42: #{tpu_custom_call.1} parent=39 // pred_check_branch
          %486 = sbr.rel (%p484) target = $region44
        $region43: #{tpu_custom_call.1} parent=39 // pred_region
          %s487 = sand.u32 %s94, 1
          %s488 = scalar_lea.sflag [#allocation3], %s487
          %s489 = sand.u32 %s94, 1
          %s490 = smul.addr %s489, 64
          %s491 = scalar_lea.vmem [#allocation2], %s490
          %492 = dma.done %s488, 1024
        $region44: #{tpu_custom_call.1} parent=39 // pred_fallthru
          _
      $region40: #{tpu_custom_call.1} parent=5 // pred_fallthru
        _
    $region6: #{tpu_custom_call.1} parent=1 // loop_footer
      %s16 = sadd.s32 1, %s12
    $region7: #{tpu_custom_call.1} parent=1 // loop_footer_branch
      %11 = sbr.rel target = $region3
    $region8: #{tpu_custom_call.1} parent=1 // loop_exit
      _
    %493 = vsyncpa [#allocation3], 1
    %s494 = scalar_lea.sflag [#allocation3], 1
    %495 = vsyncpa %s494, 1

// kernel: tpu_custom_call.1
$region0: #{tpu_custom_call.1}
  #allocation0 [shape = 'u32[]', space=smem, size = 0x4, offset = 0x4, fixed_abs, tag = 'smem constant byte address 0x4 - core index']
  #allocation1 [shape = 'u32[144,128]{1,0:T(1,128)}', space=vmem, size = 0x12000, scoped, tag = 'internal scratch']
  %s0 = inlined_call_operand.vmem [shape: f32[4,32,4], index: 0, kind: input, shape index: {}]
  %s1 = inlined_call_operand.vmem [shape: f32[12,128], index: 1, kind: input, shape index: {}]
  %s2 = inlined_call_operand.vmem [shape: f32[32,128], index: 2, kind: input, shape index: {}]
  %s3 = inlined_call_operand.hbm [shape: f32[4,32,128], index: 3, kind: output, shape index: {}]
  %s4 = sld [smem:[#allocation0]]
  $region45: #{tpu_custom_call.1} parent=0
    _
  %s6 = ssub.s32 1, %s4
  %s7 = scalar_select 0, %s6, %s4
  $region1: #{tpu_custom_call.1} parent=0
    #allocation2 [shape = 'u8[65536]{0}', space=vmem, size = 0x10000, scoped, tag = 'output window, operand 0']
    #allocation3 [shape = 's32[2]{0}', space=sflag, size = 0x8, scoped, tag = 'scoped memory for tpu_custom_call.1']
    %8 = vsyncpa [#allocation3], 0
    %s9 = scalar_lea.sflag [#allocation3], 1
    %10 = vsyncpa %s9, 0
    loop: start=0, step=1, limit=4
    $region2: #{tpu_custom_call.1} parent=1 // loop_pre_header
      _
    $region3: #{tpu_custom_call.1} parent=1 // loop_header
      %s12 = sphi 0, %s16
      %p13 = scmp.ge.s32.totalorder %s12, 4
      %s22 = sphi 0, %s24
      %s25 = sphi 0, %s22
      %s26 = sphi 0, %s25
      %s42 = sphi 0, %s26
      %s46 = sphi 0, %s46
      %s48 = sphi 0, %s46
      %s49 = sphi 0, %s48
      %s63 = sphi 0, %s49
      %s67 = sphi 0, %s67
      %s69 = sphi 0, %s67
      %s70 = sphi 0, %s69
      %s84 = sphi 0, %s70
      %s90 = sphi 0, %s92
      %s93 = sphi 0, %s90
      %s94 = sphi 0, %s93
      %s110 = sphi 0, %s94
    $region4: #{tpu_custom_call.1} parent=1 // loop_header_branch
      %15 = sbr.rel (%p13) target = $region8
    $region5: #{tpu_custom_call.1} parent=1 // loop_body
      %s17 = ssub.s32 %s12, 1
      %s18 = ssub.s32 %s12, 2
      %s19 = sadd.s32 %s12, 1
      %s20 = ssub.s32 %s12, %s19
      %p21 = scmp.eq.s32.totalorder %s20, 0
      %s23 = sadd.s32 %s22, 1
      %s24 = scalar_select %p21, %s22, %s23
      %p27 = pneg %p21
      %p28 = scmp.eq.s32.totalorder %s12, 1
      %p29 = por %p27, %p28
      %p30 = scmp.ne.s32.totalorder %s22, %s25
      %p31 = scmp.eq.s32.totalorder %s12, 0
      %p32 = por %p30, %p31
      %p33 = scmp.ne.s32.totalorder %s22, %s25
      %p34 = scmp.eq.s32.totalorder %s17, 1
      %p35 = por %p33, %p34
      %p36 = scmp.ne.s32.totalorder %s25, %s26
      %p37 = scmp.eq.s32.totalorder %s17, 0
      %p38 = por %p36, %p37
      %p39 = scmp.ne.s32.totalorder %s25, %s26
      %p40 = scmp.eq.s32.totalorder %s18, 1
      %p41 = por %p39, %p40
      %p43 = scmp.ne.s32.totalorder %s26, %s42
      %p44 = scmp.eq.s32.totalorder %s18, 0
      %p45 = por %p43, %p44
      %s47 = sadd.s32 %s46, 1
      %p50 = scmp.eq.s32.totalorder %s12, 1
      %p51 = scmp.ne.s32.totalorder %s46, %s48
      %p52 = scmp.eq.s32.totalorder %s12, 0
      %p53 = por %p51, %p52
      %p54 = scmp.ne.s32.totalorder %s46, %s48
      %p55 = scmp.eq.s32.totalorder %s17, 1
      %p56 = por %p54, %p55
      %p57 = scmp.ne.s32.totalorder %s48, %s49
      %p58 = scmp.eq.s32.totalorder %s17, 0
      %p59 = por %p57, %p58
      %p60 = scmp.ne.s32.totalorder %s48, %s49
      %p61 = scmp.eq.s32.totalorder %s18, 1
      %p62 = por %p60, %p61
      %p64 = scmp.ne.s32.totalorder %s49, %s63
      %p65 = scmp.eq.s32.totalorder %s18, 0
      %p66 = por %p64, %p65
      %s68 = sadd.s32 %s67, 1
      %p71 = scmp.eq.s32.totalorder %s12, 1
      %p72 = scmp.ne.s32.totalorder %s67, %s69
      %p73 = scmp.eq.s32.totalorder %s12, 0
      %p74 = por %p72, %p73
      %p75 = scmp.ne.s32.totalorder %s67, %s69
      %p76 = scmp.eq.s32.totalorder %s17, 1
      %p77 = por %p75, %p76
      %p78 = scmp.ne.s32.totalorder %s69, %s70
      %p79 = scmp.eq.s32.totalorder %s17, 0
      %p80 = por %p78, %p79
      %p81 = scmp.ne.s32.totalorder %s69, %s70
      %p82 = scmp.eq.s32.totalorder %s18, 1
      %p83 = por %p81, %p82
      %p85 = scmp.ne.s32.totalorder %s70, %s84
      %p86 = scmp.eq.s32.totalorder %s18, 0
      %p87 = por %p85, %p86
      %s88 = ssub.s32 %s12, %s19
      %p89 = scmp.eq.s32.totalorder %s88, 0
      %s91 = sadd.s32 %s90, 1
      %s92 = scalar_select %p89, %s90, %s91
      %p95 = pneg %p89
      %p96 = scmp.eq.s32.totalorder %s12, 1
      %p97 = por %p95, %p96
      %p98 = scmp.ne.s32.totalorder %s90, %s93
      %p99 = scmp.eq.s32.totalorder %s12, 0
      %p100 = por %p98, %p99
      %p101 = scmp.ne.s32.totalorder %s90, %s93
      %p102 = scmp.eq.s32.totalorder %s17, 1
      %p103 = por %p101, %p102
      %p104 = scmp.ne.s32.totalorder %s93, %s94
      %p105 = scmp.eq.s32.totalorder %s17, 0
      %p106 = por %p104, %p105
      %p107 = scmp.ne.s32.totalorder %s93, %s94
      %p108 = scmp.eq.s32.totalorder %s18, 1
      %p109 = por %p107, %p108
      %p111 = scmp.ne.s32.totalorder %s94, %s110
      %p112 = scmp.eq.s32.totalorder %s18, 0
      %p113 = por %p111, %p112
      %p114 = scmp.le.s32.totalorder 1, %s12
      %p115 = scmp.lt.s32.totalorder %s12, 3
      %p116 = pnand %p114, %p115
      %p117 = pneg %p116
      // Predicated region
      $region9: #{tpu_custom_call.1} parent=5 // pred_check
        _
      $region10: #{tpu_custom_call.1} parent=5 // pred_check_branch
        %119 = sbr.rel (%p116) target = $region12
      $region11: #{tpu_custom_call.1} parent=5 // pred_region
        %s120 = ssub.s32 %s12, 1
        // Predicated region
        $region13: #{tpu_custom_call.1} parent=11 // pred_check
          %p121 = pneg %p59
        $region14: #{tpu_custom_call.1} parent=11 // pred_check_branch
          %123 = sbr.rel (%p121) target = $region16
        $region15: #{tpu_custom_call.1} parent=11 // pred_region
          _
        $region16: #{tpu_custom_call.1} parent=11 // pred_fallthru
          _
        // Predicated region
        $region17: #{tpu_custom_call.1} parent=11 // pred_check
          %p124 = pneg %p80
        $region18: #{tpu_custom_call.1} parent=11 // pred_check_branch
          %126 = sbr.rel (%p124) target = $region20
        $region19: #{tpu_custom_call.1} parent=11 // pred_region
          _
        $region20: #{tpu_custom_call.1} parent=11 // pred_fallthru
          _
      $region12: #{tpu_custom_call.1} parent=5 // pred_fallthru
        _
      %p127 = scmp.lt.s32.totalorder %s12, 2
      // Predicated region
      $region21: #{tpu_custom_call.1} parent=5 // pred_check
        %p128 = pneg %p127
      $region22: #{tpu_custom_call.1} parent=5 // pred_check_branch
        %130 = sbr.rel (%p128) target = $region24
      $region23: #{tpu_custom_call.1} parent=5 // pred_region
        // Predicated region
        $region25: #{tpu_custom_call.1} parent=23 // pred_check
          %p131 = pneg %p32
        $region26: #{tpu_custom_call.1} parent=23 // pred_check_branch
          %133 = sbr.rel (%p131) target = $region28
        $region27: #{tpu_custom_call.1} parent=23 // pred_region
          %s134 = smul.u32 2, %s12
          %p135 = scmp.lt.s32.totalorder %s134, 3
          %s136 = scalar_select %p135, %s134, 3
          %s137 = smul.addr %s136, 4
          %s138 = smul.addr %s137, 8
          %s139 = scalar_lea.vmem %s0, %s138
          %s140 = smul.u32 2, %s12
        $region28: #{tpu_custom_call.1} parent=23 // pred_fallthru
          _
      $region24: #{tpu_custom_call.1} parent=5 // pred_fallthru
        _
      %p141 = scmp.le.s32.totalorder 1, %s12
      %p142 = scmp.lt.s32.totalorder %s12, 3
      %p143 = pnand %p141, %p142
      %p144 = pneg %p143
      // Predicated region
      $region29: #{tpu_custom_call.1} parent=5 // pred_check
        _
      $region30: #{tpu_custom_call.1} parent=5 // pred_check_branch
        %146 = sbr.rel (%p143) target = $region32
      $region31: #{tpu_custom_call.1} parent=5 // pred_region
        %s147 = ssub.s32 %s12, 1
        %s148 = smul.u32 2, %s17
        %p149 = scmp.lt.s32.totalorder %s148, 3
        %s150 = scalar_select %p149, %s148, 3
        %s151 = smul.addr %s150, 4
        %s152 = smul.addr %s151, 8
        %s153 = scalar_lea.vmem %s0, %s152
        %p154 = pneg %p38
        %p155 = pneg %p35
        %p156 = pneg %p59
        %p157 = pneg %p56
        %p158 = pneg %p80
        %p159 = pneg %p77
        %p160 = pneg %p106
        %p161 = pneg %p103
        %s162 = sand.u32 %s93, 1
        %s163 = scalar_lea.sflag [#allocation3], %s162
        %s164 = sand.u32 %s93, 1
        %s165 = smul.addr %s164, 64
        %s166 = scalar_lea.vmem [#allocation2], %s165
        %s167 = smul.u32 2, %s17
        %p168 = scmp.lt.s32.totalorder %s167, 3
        %s169 = scalar_select %p168, %s167, 3
        %s170 = smul.addr %s169, 4
        %s171 = smul.addr %s170, 8
        %s172 = scalar_lea.vmem %s0, %s171
        %s173 = smul.u32 2, %s17
        %s174 = smul.u32 2, %s17
        %v175 = vld [vmem:[%s172] sm:$0xff]
        %v176 = vld [vmem:[%s172 + $0x8] sm:$0xff]
        %v177 = vld [vmem:[%s172 + $0x10] sm:$0xff]
        %v178 = vld [vmem:[%s172 + $0x18] sm:$0xff]
        %v179 = vld [vmem:[%s172 + $0x20] sm:$0xff]
        %v180 = vld [vmem:[%s172 + $0x28] sm:$0xff]
        %v181 = vld [vmem:[%s172 + $0x30] sm:$0xff]
        %v182 = vld [vmem:[%s172 + $0x38] sm:$0xff]
        %v183 = vrot.slane %v175, 7
        %v184 = vrot.slane %v179, 7
        %v185 = vrot.slane %v176, 7
        %v186 = vrot.slane %v180, 7
        %v187 = vrot.slane %v177, 7
        %v188 = vrot.slane %v181, 7
        %v189 = vrot.slane %v178, 7
        %v190 = vrot.slane %v182, 7
        %v191 = vlaneseq
        %v192 = vshrl.u32 %v191, 7
        %vm193 = vcmp.lt.s32.totalorder %v192, 1
        %v194 = vsel %vm193, %v187, %v189
        %v195 = vsel %vm193, %v188, %v190
        %v196 = vsel %vm193, %v185, %v187
        %v197 = vsel %vm193, %v186, %v188
        %v198 = vsel %vm193, %v183, %v185
        %v199 = vsel %vm193, %v184, %v186
        %v200 = vsel %vm193, %v189, %v183
        %v201 = vsel %vm193, %v190, %v184
        %v202 = vrot.slane %v175, 1
        %v203 = vrot.slane %v179, 1
        %v204 = vrot.slane %v176, 1
        %v205 = vrot.slane %v180, 1
        %v206 = vrot.slane %v177, 1
        %v207 = vrot.slane %v181, 1
        %v208 = vrot.slane %v178, 1
        %v209 = vrot.slane %v182, 1
        %vm210 = vcmp.lt.s32.totalorder %v192, 7
        %v211 = vsel %vm210, %v206, %v208
        %v212 = vsel %vm210, %v207, %v209
        %v213 = vsel %vm210, %v204, %v206
        %v214 = vsel %vm210, %v205, %v207
        %v215 = vsel %vm210, %v202, %v204
        %v216 = vsel %vm210, %v203, %v205
        %v217 = vsel %vm210, %v208, %v202
        %v218 = vsel %vm210, %v209, %v203
        %227 = vrot.lane.b32.xlu0 %v175, 4
        %v228 = vpop.permute.xlu0 %227
        %229 = vrot.lane.b32.xlu0 %v176, 4
        %v230 = vpop.permute.xlu0 %229
        %231 = vrot.lane.b32.xlu0 %v177, 4
        %v232 = vpop.permute.xlu0 %231
        %233 = vrot.lane.b32.xlu0 %v178, 4
        %v234 = vpop.permute.xlu0 %233
        %235 = vrot.lane.b32.xlu0 %v179, 4
        %v236 = vpop.permute.xlu0 %235
        %237 = vrot.lane.b32.xlu0 %v180, 4
        %v238 = vpop.permute.xlu0 %237
        %239 = vrot.lane.b32.xlu0 %v181, 4
        %v240 = vpop.permute.xlu0 %239
        %241 = vrot.lane.b32.xlu0 %v182, 4
        %v242 = vpop.permute.xlu0 %241
        %259 = vrot.lane.b32.xlu0 %v215, 8
        %v260 = vpop.permute.xlu0 %259
        %261 = vrot.lane.b32.xlu0 %v213, 8
        %v262 = vpop.permute.xlu0 %261
        %263 = vrot.lane.b32.xlu0 %v211, 8
        %v264 = vpop.permute.xlu0 %263
        %265 = vrot.lane.b32.xlu0 %v217, 8
        %v266 = vpop.permute.xlu0 %265
        %267 = vrot.lane.b32.xlu0 %v216, 8
        %v268 = vpop.permute.xlu0 %267
        %269 = vrot.lane.b32.xlu0 %v214, 8
        %v270 = vpop.permute.xlu0 %269
        %271 = vrot.lane.b32.xlu0 %v212, 8
        %v272 = vpop.permute.xlu0 %271
        %273 = vrot.lane.b32.xlu0 %v218, 8
        %v274 = vpop.permute.xlu0 %273
        %vm283 = vcmask 31744
        %v284 = vsel %vm283, %v200, %v228
        %v285 = vsel %vm283, %v198, %v230
        %v286 = vsel %vm283, %v196, %v232
        %v287 = vsel %vm283, %v194, %v234
        %v288 = vsel %vm283, %v201, %v236
        %v289 = vsel %vm283, %v199, %v238
        %v290 = vsel %vm283, %v197, %v240
        %v291 = vsel %vm283, %v195, %v242
        %vm292 = vcmask 64512
        %v293 = vsel %vm292, %v284, %v260
        %v294 = vsel %vm292, %v285, %v262
        %v295 = vsel %vm292, %v286, %v264
        %v296 = vsel %vm292, %v287, %v266
        %v297 = vsel %vm292, %v288, %v268
        %v298 = vsel %vm292, %v289, %v270
        %v299 = vsel %vm292, %v290, %v272
        %v300 = vsel %vm292, %v291, %v274
        %v301 = vld [vmem:[%s1] sm:$0xff]
        %v302 = vld [vmem:[%s1 + $0x8] sm:$0xf]
        %vm303 = vcmask 97280
        %v305 = vsel %vm303, %v293, 0
        %v308 = vsel %vm303, %v294, 0
        %v311 = vsel %vm303, %v295, 0
        %v314 = vsel %vm303, %v296, 0
        %v317 = vsel %vm303, %v297, 0
        %v320 = vsel %vm303, %v298, 0
        %v323 = vsel %vm303, %v299, 0
        %v326 = vsel %vm303, %v300, 0
        %vm328 = vcmask 1043456
        %v330 = vsel %vm328, %v302, 0
        %332 = vmatprep.subr.mxu0 0.0
        %333 = vmatpush1.msra.mxu0 %v301
        %334 = vmatprep.subr.mxu0 0.0
        %335 = vmatpush1.msra.mxu0 %v330
        %336 = vmatprep.subr.mxu0 0.0
        %337 = vmatpush1.msra.mxu0 0.0
        %338 = vmatprep.subr.mxu0 0.0
        %339 = vmatpush1.msra.mxu0 0.0
        %340 = vmatprep.subr.mxu0 0.0
        %341 = vmatpush1.msra.mxu0 0.0
        %342 = vmatprep.subr.mxu0 0.0
        %343 = vmatpush1.msra.mxu0 0.0
        %344 = vmatprep.subr.mxu0 0.0
        %345 = vmatpush1.msra.mxu0 0.0
        %346 = vmatprep.subr.mxu0 0.0
        %347 = vmatpush1.msra.mxu0 0.0
        %348 = vmatprep.subr.mxu0 0.0
        %349 = vmatpush1.msra.mxu0 0.0
        %350 = vmatprep.subr.mxu0 0.0
        %351 = vmatpush1.msra.mxu0 0.0
        %352 = vmatprep.subr.mxu0 0.0
        %353 = vmatpush1.msra.mxu0 0.0
        %354 = vmatprep.subr.mxu0 0.0
        %355 = vmatpush1.msra.mxu0 0.0
        %356 = vmatprep.subr.mxu0 0.0
        %357 = vmatpush1.msra.mxu0 0.0
        %358 = vmatprep.subr.mxu0 0.0
        %359 = vmatpush1.msra.mxu0 0.0
        %360 = vmatprep.subr.mxu0 0.0
        %361 = vmatpush1.msra.mxu0 0.0
        %362 = vmatprep.subr.mxu0 0.0
        %363 = vmatpush1.msra.mxu0 0.0
        %364 = vmatprep.subr.mxu0 0.0
        %365 = vmatpush1.msra.mxu0 0.0
        %366 = vmatprep.subr.mxu0 0.0
        %367 = vmatpush1.msra.mxu0 0.0
        %368 = vmatprep.subr.mxu0 0.0
        %369 = vmatpush1.msra.mxu0 0.0
        %370 = vmatprep.subr.mxu0 0.0
        %371 = vmatpush1.msra.mxu0 0.0
        %372 = vmatprep.subr.mxu0 0.0
        %373 = vmatpush1.msra.mxu0 0.0
        %374 = vmatprep.subr.mxu0 0.0
        %375 = vmatpush1.msra.mxu0 0.0
        %376 = vmatprep.subr.mxu0 0.0
        %377 = vmatpush1.msra.mxu0 0.0
        %378 = vmatprep.subr.mxu0 0.0
        %379 = vmatpush1.msra.mxu0 0.0
        %380 = vmatprep.subr.mxu0 0.0
        %381 = vmatpush1.msra.mxu0 0.0
        %382 = vmatprep.subr.mxu0 0.0
        %383 = vmatpush1.msra.mxu0 0.0
        %384 = vmatprep.subr.mxu0 0.0
        %385 = vmatpush1.msra.mxu0 0.0
        %386 = vmatprep.subr.mxu0 0.0
        %387 = vmatpush1.msra.mxu0 0.0
        %388 = vmatprep.subr.mxu0 0.0
        %389 = vmatpush1.msra.mxu0 0.0
        %390 = vmatprep.subr.mxu0 0.0
        %391 = vmatpush1.msra.mxu0 0.0
        %392 = vmatprep.subr.mxu0 0.0
        %393 = vmatpush1.msra.mxu0 0.0
        %394 = vmatprep.subr.mxu0 0.0
        %395 = vmatpush1.msra.mxu0 0.0
        %396 = vmatprep.mubr.f32.mxu0 0.0
        %397 = vmatmul.mubr.f32.gmra.mrb[0].mxu0 %v305
        %v398 = vpop.f32.mrb[0].mxu0
        %v399 = vadd.f32 0.0, %v398
        %v400 = vpop.f32.mrb[0].mxu0
        %401 = vmatprep.mubr.f32.mxu0 0.0
        %402 = vmatmul.mubr.f32.gmra.mrb[0].mxu0 %v308
        %v403 = vpop.f32.mrb[0].mxu0
        %v404 = vadd.f32 0.0, %v403
        %v405 = vpop.f32.mrb[0].mxu0
        %406 = vmatprep.mubr.f32.mxu0 0.0
        %407 = vmatmul.mubr.f32.gmra.mrb[0].mxu0 %v311
        %v408 = vpop.f32.mrb[0].mxu0
        %v409 = vadd.f32 0.0, %v408
        %v410 = vpop.f32.mrb[0].mxu0
        %411 = vmatprep.mubr.f32.mxu0 0.0
        %412 = vmatmul.mubr.f32.gmra.mrb[0].mxu0 %v314
        %v413 = vpop.f32.mrb[0].mxu0
        %v414 = vadd.f32 0.0, %v413
        %v415 = vpop.f32.mrb[0].mxu0
        %416 = vmatprep.mubr.f32.mxu0 0.0
        %417 = vmatmul.mubr.f32.gmra.mrb[0].mxu0 %v317
        %v418 = vpop.f32.mrb[0].mxu0
        %v419 = vadd.f32 0.0, %v418
        %v420 = vpop.f32.mrb[0].mxu0
        %421 = vmatprep.mubr.f32.mxu0 0.0
        %422 = vmatmul.mubr.f32.gmra.mrb[0].mxu0 %v320
        %v423 = vpop.f32.mrb[0].mxu0
        %v424 = vadd.f32 0.0, %v423
        %v425 = vpop.f32.mrb[0].mxu0
        %426 = vmatprep.mubr.f32.mxu0 0.0
        %427 = vmatmul.mubr.f32.gmra.mrb[0].mxu0 %v323
        %v428 = vpop.f32.mrb[0].mxu0
        %v429 = vadd.f32 0.0, %v428
        %v430 = vpop.f32.mrb[0].mxu0
        %431 = vmatprep.mubr.f32.mxu0 0.0
        %432 = vmatmul.mubr.f32.gmra.mrb[0].mxu0 %v326
        %v433 = vpop.f32.mrb[0].mxu0
        %v434 = vadd.f32 0.0, %v433
        %v435 = vpop.f32.mrb[0].mxu0
        %436 = vdwg.mxu0
        %v437 = vld [vmem:[%s2] sm:$0xff]
        %v438 = vld [vmem:[%s2 + $0x8] sm:$0xff]
        %v439 = vld [vmem:[%s2 + $0x10] sm:$0xff]
        %v440 = vld [vmem:[%s2 + $0x18] sm:$0xff]
        %v441 = vadd.f32 %v399, %v437
        %v442 = vadd.f32 %v404, %v438
        %v443 = vadd.f32 %v409, %v439
        %v444 = vadd.f32 %v414, %v440
        %v445 = vadd.f32 %v419, %v437
        %v446 = vadd.f32 %v424, %v438
        %v447 = vadd.f32 %v429, %v439
        %v448 = vadd.f32 %v434, %v440
        %449 = vst [vmem:[%s166] sm:$0xff] %v441
        %450 = vst [vmem:[%s166 + $0x8] sm:$0xff] %v442
        %451 = vst [vmem:[%s166 + $0x10] sm:$0xff] %v443
        %452 = vst [vmem:[%s166 + $0x18] sm:$0xff] %v444
        %453 = vst [vmem:[%s166 + $0x20] sm:$0xff] %v445
        %454 = vst [vmem:[%s166 + $0x28] sm:$0xff] %v446
        %455 = vst [vmem:[%s166 + $0x30] sm:$0xff] %v447
        %456 = vst [vmem:[%s166 + $0x38] sm:$0xff] %v448
        %s457 = sand.u32 %s93, 1
        %s458 = scalar_lea.sflag [#allocation3], %s457
        %s459 = sand.u32 %s93, 1
        %s460 = smul.addr %s459, 64
        %s461 = scalar_lea.vmem [#allocation2], %s460
        // Predicated region
        $region33: #{tpu_custom_call.1} parent=31 // pred_check
          %p462 = pneg %p103
        $region34: #{tpu_custom_call.1} parent=31 // pred_check_branch
          %464 = sbr.rel (%p462) target = $region36
        $region35: #{tpu_custom_call.1} parent=31 // pred_region
          %s465 = smul.u32 2, %s17
          %s467 = ssub.s32 1024, 1024
          %468 = vsyncadd %s458, %s467
          %s469 = smul.addr %s465, 4
          %s470 = smul.addr %s469, 128
          %s471 = scalar_lea.hbm %s3, %s470
          %s472 = sshll.u32 %s461, 4
          %s473 = int_to_ptr.vmem [resolvable:$true] %s472
          %478 = dma.vmem_to_hbm [thread:$0]  %s473, 1024, %s471, %s458, 128, 128, 8
        $region36: #{tpu_custom_call.1} parent=31 // pred_fallthru
          _
      $region32: #{tpu_custom_call.1} parent=5 // pred_fallthru
        _
      %p479 = scmp.le.s32.totalorder 2, %s12
      // Predicated region
      $region37: #{tpu_custom_call.1} parent=5 // pred_check
        %p480 = pneg %p479
      $region38: #{tpu_custom_call.1} parent=5 // pred_check_branch
        %482 = sbr.rel (%p480) target = $region40
      $region39: #{tpu_custom_call.1} parent=5 // pred_region
        %s483 = ssub.s32 %s12, 2
        // Predicated region
        $region41: #{tpu_custom_call.1} parent=39 // pred_check
          %p484 = pneg %p109
        $region42: #{tpu_custom_call.1} parent=39 // pred_check_branch
          %486 = sbr.rel (%p484) target = $region44
        $region43: #{tpu_custom_call.1} parent=39 // pred_region
          %s487 = sand.u32 %s94, 1
          %s488 = scalar_lea.sflag [#allocation3], %s487
          %s489 = sand.u32 %s94, 1
          %s490 = smul.addr %s489, 64
          %s491 = scalar_lea.vmem [#allocation2], %s490
          %492 = dma.done %s488, 1024
        $region44: #{tpu_custom_call.1} parent=39 // pred_fallthru
          _
      $region40: #{tpu_custom_call.1} parent=5 // pred_fallthru
        _
    $region6: #{tpu_custom_call.1} parent=1 // loop_footer
      %s16 = sadd.s32 1, %s12
    $region7: #{tpu_custom_call.1} parent=1 // loop_footer_branch
      %11 = sbr.rel target = $region3
    $region8: #{tpu_custom_call.1} parent=1 // loop_exit
      _
    %493 = vsyncpa [#allocation3], 1
    %s494 = scalar_lea.sflag [#allocation3], 1
    %495 = vsyncpa %s494, 1

</llo_original>
